<compile_context>
chip_gen: v6e
topology: v6e:2x2x1
jax: 0.10.0
libtpu: 0.0.40
codegen_flags: <defaults>
</compile_context>

<pallas_src>
import functools

import jax
import jax.numpy as jnp
from jax import lax
from jax.experimental import pallas as pl
from jax.experimental.pallas import tpu as pltpu

EPS = 1e-5


# ----------------------------- kernels ------------------------------------ #


def _fused_kernel(x_ref, gamma_ref, o_ref):
    # x_ref: (bB, L, C) block; gamma_ref: (1, C).  beta cancels in
    # x_hat - mean_L(x_hat), so it is never read.
    x = x_ref[...].astype(jnp.float32)                        # (bB, L, C)

    # nn.LayerNorm over channels (biased variance, eps inside rsqrt).
    mean = jnp.mean(x, axis=-1, keepdims=True)                # (bB, L, 1)
    c = x - mean
    var = jnp.mean(c * c, axis=-1, keepdims=True)
    z = c * lax.rsqrt(var + EPS)                              # un-scaled x_hat

    # Subtract the per-(batch, channel) mean over L, then fold gamma in once.
    bias = jnp.mean(z, axis=1, keepdims=True)                 # (bB, 1, C)
    o_ref[...] = ((z - bias) * gamma_ref[...][:, None, :]).astype(o_ref.dtype)


def _mean_pass_kernel(x_ref, mean_ref, sum_sc, *, L, inv_L):
    # Pass 1 of the L-tiled fallback: stream x, accumulate sum_L(z) in a tiny
    # (1, 1, C) f32 scratch, emit the per-(B, C) sequence mean on the last
    # L step.  gamma / beta are not needed here (gamma folded in pass 2,
    # beta cancels).
    l = pl.program_id(1)
    tL = x_ref.shape[1]

    @pl.when(l == 0)
    def _():
        sum_sc[...] = jnp.zeros_like(sum_sc)

    # Mask rows past the true sequence length (ragged edge tile): masked rows
    # become exactly zero and contribute nothing to the sum.
    row = l * tL + lax.broadcasted_iota(jnp.int32, (1, tL, 1), 1)
    x = jnp.where(row < L, x_ref[...].astype(jnp.float32), 0.0)   # (1, tL, C)

    mean = jnp.mean(x, axis=-1, keepdims=True)
    c = x - mean
    var = jnp.mean(c * c, axis=-1, keepdims=True)
    z = c * lax.rsqrt(var + EPS)
    sum_sc[...] += jnp.sum(z, axis=1, keepdims=True)

    @pl.when(l == pl.num_programs(1) - 1)
    def _():
        mean_ref[...] = (sum_sc[...] * inv_L).astype(mean_ref.dtype)


def _apply_pass_kernel(x_ref, gamma_ref, mean_ref, o_ref):
    # Pass 2 of the fallback: re-read x, recompute the per-row LayerNorm
    # (hidden under the streaming DMA), subtract the sequence mean and fold
    # gamma in.  Edge-tile rows beyond L compute garbage but their stores are
    # dropped by Pallas (out-of-bounds block writes are discarded).
    x = x_ref[...].astype(jnp.float32)                        # (1, tL, C)
    mean = jnp.mean(x, axis=-1, keepdims=True)
    c = x - mean
    var = jnp.mean(c * c, axis=-1, keepdims=True)
    z = c * lax.rsqrt(var + EPS)
    o_ref[...] = ((z - mean_ref[...]) * gamma_ref[...][:, None, :]).astype(
        o_ref.dtype)


# ----------------------------- wrappers ------------------------------------ #


def _round_up(n, m):
    return -(-n // m) * m


def _largest_divisor_leq(n, cap):
    cap = max(1, min(n, cap))
    for d in range(cap, 0, -1):
        if n % d == 0:
            return d
    return 1


def _vmem_limit_and_budget():
    """(scoped vmem limit, per-call block budget) from the chip's VMEM size."""
    try:
        cap = int(pltpu.get_tpu_info().vmem_capacity_bytes)
    except Exception:  # unknown chip / CPU interpreter: assume worst case
        cap = 64 * 1024 * 1024
    # Leave >= 16 MiB headroom for compiler-internal scratch / semaphores so
    # double-buffering never gets dropped on this pure streaming kernel.
    limit = min((cap * 3) // 4, cap - 16 * 1024 * 1024)
    limit = max(limit, 32 * 1024 * 1024)
    return limit, limit // 2


def _fused_call(x, gamma2, bB, vmem_limit):
    B, L, C = x.shape
    return pl.pallas_call(
        _fused_kernel,
        out_shape=jax.ShapeDtypeStruct((B, L, C), x.dtype),
        grid_spec=pltpu.PrefetchScalarGridSpec(
            num_scalar_prefetch=0,
            grid=(B // bB,),
            in_specs=[
                pl.BlockSpec((bB, L, C), lambda b: (b, 0, 0)),
                pl.BlockSpec((1, C), lambda b: (0, 0)),
            ],
            out_specs=pl.BlockSpec((bB, L, C), lambda b: (b, 0, 0)),
        ),
        compiler_params=pltpu.CompilerParams(
            dimension_semantics=("parallel",),
            vmem_limit_bytes=vmem_limit,
        ),
    )(x, gamma2)


def _two_pass_call(x, gamma2, tL, vmem_limit):
    B, L, C = x.shape
    Lt = pl.cdiv(L, tL)

    # Pass 1: per-(B, C) sequence mean of the un-scaled normalized rows.
    mean_z = pl.pallas_call(
        functools.partial(_mean_pass_kernel, L=L, inv_L=1.0 / L),
        out_shape=jax.ShapeDtypeStruct((B, 1, C), jnp.float32),
        grid_spec=pltpu.PrefetchScalarGridSpec(
            num_scalar_prefetch=0,
            grid=(B, Lt),
            in_specs=[pl.BlockSpec((1, tL, C), lambda b, l: (b, l, 0))],
            out_specs=pl.BlockSpec((1, 1, C), lambda b, l: (b, 0, 0)),
            scratch_shapes=[pltpu.VMEM((1, 1, C), jnp.float32)],
        ),
        compiler_params=pltpu.CompilerParams(
            dimension_semantics=("parallel", "arbitrary"),
            vmem_limit_bytes=vmem_limit,
        ),
    )(x)

    # Pass 2: re-read x, recompute LN per row, write gamma * (z - mean_z).
    return pl.pallas_call(
        _apply_pass_kernel,
        out_shape=jax.ShapeDtypeStruct((B, L, C), x.dtype),
        grid_spec=pltpu.PrefetchScalarGridSpec(
            num_scalar_prefetch=0,
            grid=(B, Lt),
            in_specs=[
                pl.BlockSpec((1, tL, C), lambda b, l: (b, l, 0)),
                pl.BlockSpec((1, C), lambda b, l: (0, 0)),
                pl.BlockSpec((1, 1, C), lambda b, l: (b, 0, 0)),
            ],
            out_specs=pl.BlockSpec((1, tL, C), lambda b, l: (b, l, 0)),
        ),
        compiler_params=pltpu.CompilerParams(
            dimension_semantics=("parallel", "parallel"),
            vmem_limit_bytes=vmem_limit,
        ),
    )(x, gamma2, mean_z)


def my_layer_norm(x, gamma, beta=None, *, max_block_bytes=None):
    """x: (B, L, C); gamma, beta: (C,).  Returns (B, L, C).

    beta is accepted for API parity with nn.LayerNorm but never read: it is
    algebraically cancelled by the sequence-mean subtraction.
    `max_block_bytes` optionally overrides the VMEM-derived block budget
    (mainly to force the L-tiled two-pass path at small test shapes).
    """
    del beta  # cancels in x_hat - mean_L(x_hat)
    B, L, C = x.shape
    gamma2 = gamma.reshape(1, C).astype(jnp.float32)

    vmem_limit, budget = _vmem_limit_and_budget()
    if max_block_bytes is not None:
        budget = max_block_bytes

    # Padded (sublane x 128-lane) VMEM cost per sequence row of a streamed
    # block: double-buffered in + out blocks in x's dtype plus ~3 f32
    # temporaries the compiler materializes for the LayerNorm math.
    itemsize = jnp.dtype(x.dtype).itemsize
    sub = {4: 8, 2: 16, 1: 32}.get(itemsize, 8)
    Cp = _round_up(C, 128)
    Lp = _round_up(L, sub)
    row_bytes = Cp * (4 * itemsize + 3 * 4)

    if Lp * row_bytes <= budget:
        # Fused single-pass path (2x HBM traffic): pack batch rows per block,
        # but keep >= 2 grid steps when B >= 2 so v7x can use both TCs.
        bB = _largest_divisor_leq(B, max(1, budget // (Lp * row_bytes)))
        if B >= 2 and B // bB < 2:
            bB = _largest_divisor_leq(B, max(1, B // 2))
        return _fused_call(x, gamma2, bB, vmem_limit)

    # L-tiled two-pass fallback (3x HBM traffic): budget-filling tile length,
    # sublane-aligned; ragged L handled via cdiv grid + in-kernel masking.
    tL = max(sub, (min(budget // row_bytes, Lp) // sub) * sub)
    return _two_pass_call(x, gamma2, tL, vmem_limit)


# ----------------------------- reference / test ---------------------------- #


def _reference(x, gamma, beta):
    xf = x.astype(jnp.float32)
    mean = jnp.mean(xf, axis=-1, keepdims=True)
    var = jnp.mean((xf - mean) ** 2, axis=-1, keepdims=True)
    x_hat = (xf - mean) * lax.rsqrt(var + EPS)
    x_hat = x_hat * gamma[None, None, :] + beta[None, None, :]
    bias = jnp.mean(x_hat, axis=1, keepdims=True)
    return (x_hat - bias).astype(x.dtype)


if __name__ == "__main__":
    key = jax.random.PRNGKey(0)
    kx, kg, kb, kx2, kx3 = jax.random.split(key, 5)

    B, L, C = 2, 8, 32
    x = jax.random.normal(kx, (B, L, C), dtype=jnp.float32)
    # nn.LayerNorm default init is weight=1, bias=0; perturb deterministically
    # so the affine parameters are actually exercised.
    gamma = jnp.ones((C,), jnp.float32) + 0.1 * jax.random.normal(kg, (C,), jnp.float32)
    beta = 0.1 * jax.random.normal(kb, (C,), jnp.float32)

    # 1) Fused single-pass path (f32).
    out = jax.block_until_ready(my_layer_norm(x, gamma, beta))
    ref = _reference(x, gamma, beta)
    assert out.shape == (B, L, C)
    assert jnp.allclose(out, ref, atol=1e-5, rtol=1e-5)

    # 2) L-tiled two-pass fallback with ragged L (tL=8, 3 L-steps, masked
    #    edge tile), forced via a tiny block-byte budget.
    B2, L2 = 2, 20
    x2 = jax.random.normal(kx2, (B2, L2, C), dtype=jnp.float32)
    out2 = jax.block_until_ready(
        my_layer_norm(x2, gamma, beta, max_block_bytes=8 * 128 * 28))
    ref2 = _reference(x2, gamma, beta)
    assert out2.shape == (B2, L2, C)
    assert jnp.allclose(out2, ref2, atol=1e-5, rtol=1e-5)

    # 3) Fused path with a bf16 input (dtype-aware budgeting / packing).
    x3 = jax.random.normal(kx3, (2, 16, C), dtype=jnp.float32).astype(jnp.bfloat16)
    out3 = jax.block_until_ready(my_layer_norm(x3, gamma, beta))
    ref3 = _reference(x3, gamma, beta)
    assert out3.shape == (2, 16, C)
    assert jnp.allclose(out3.astype(jnp.float32), ref3.astype(jnp.float32),
                        atol=5e-2, rtol=5e-2)

    print("KERNEL_OK")
</pallas_src>

<mosaic_0001>
module attributes {stable_mosaic.version = 11 : i64} {
  func.func @_fused_kernel(%arg0: i32, %arg1: memref<1x8x32xf32, #tpu.memory_space<vmem>>, %arg2: memref<1x32xf32, #tpu.memory_space<vmem>>, %arg3: memref<1x8x32xf32, #tpu.memory_space<vmem>>) attributes {dimension_semantics = [#tpu.dimension_semantics<parallel>], iteration_bounds = array<i64: 2>, scalar_prefetch = 0 : i64, scratch_operands = 0 : i64, tpu.core_type = #tpu.core_type<tc>, window_params = [{transform_indices = @transform_0, window_bounds = array<i64: 1, 8, 32>}, {pipeline_mode = #tpu.pipeline_mode<synchronous>, transform_indices = @transform_1, window_bounds = array<i64: 1, 32>}, {transform_indices = @transform_2, window_bounds = array<i64: 1, 8, 32>}]} {
    %c0 = arith.constant 0 : index
    %c0_0 = arith.constant 0 : index
    %c0_1 = arith.constant 0 : index
    %0 = vector.load %arg1[%c0, %c0_0, %c0_1] : memref<1x8x32xf32, #tpu.memory_space<vmem>>, vector<1x8x32xf32>
    %cst = arith.constant dense<0.000000e+00> : vector<1x8xf32>
    %1 = vector.multi_reduction <add>, %0, %cst [2] : vector<1x8x32xf32> to vector<1x8xf32>
    %2 = vector.shape_cast %1 : vector<1x8xf32> to vector<1x8x1xf32>
    %cst_2 = arith.constant 3.200000e+01 : f32
    %3 = vector.broadcast %cst_2 : f32 to vector<1x8x1xf32>
    %4 = arith.divf %2, %3 : vector<1x8x1xf32>
    %5 = vector.broadcast %4 : vector<1x8x1xf32> to vector<1x8x32xf32>
    %6 = arith.subf %0, %5 : vector<1x8x32xf32>
    %7 = arith.mulf %6, %6 : vector<1x8x32xf32>
    %cst_3 = arith.constant dense<0.000000e+00> : vector<1x8xf32>
    %8 = vector.multi_reduction <add>, %7, %cst_3 [2] : vector<1x8x32xf32> to vector<1x8xf32>
    %9 = vector.shape_cast %8 : vector<1x8xf32> to vector<1x8x1xf32>
    %cst_4 = arith.constant 3.200000e+01 : f32
    %10 = vector.broadcast %cst_4 : f32 to vector<1x8x1xf32>
    %11 = arith.divf %9, %10 : vector<1x8x1xf32>
    %cst_5 = arith.constant 9.99999974E-6 : f32
    %12 = vector.broadcast %cst_5 : f32 to vector<1x8x1xf32>
    %13 = arith.addf %11, %12 : vector<1x8x1xf32>
    %14 = math.rsqrt %13 : vector<1x8x1xf32>
    %15 = vector.broadcast %14 : vector<1x8x1xf32> to vector<1x8x32xf32>
    %16 = arith.mulf %6, %15 : vector<1x8x32xf32>
    %cst_6 = arith.constant dense<0.000000e+00> : vector<1x32xf32>
    %17 = vector.multi_reduction <add>, %16, %cst_6 [1] : vector<1x8x32xf32> to vector<1x32xf32>
    %18 = vector.shape_cast %17 : vector<1x32xf32> to vector<1x1x32xf32>
    %cst_7 = arith.constant 8.000000e+00 : f32
    %19 = vector.broadcast %cst_7 : f32 to vector<1x1x32xf32>
    %20 = arith.divf %18, %19 : vector<1x1x32xf32>
    %21 = vector.broadcast %20 : vector<1x1x32xf32> to vector<1x8x32xf32>
    %22 = arith.subf %16, %21 : vector<1x8x32xf32>
    %c0_8 = arith.constant 0 : index
    %c0_9 = arith.constant 0 : index
    %23 = vector.load %arg2[%c0_8, %c0_9] : memref<1x32xf32, #tpu.memory_space<vmem>>, vector<1x32xf32>
    %24 = vector.shape_cast %23 : vector<1x32xf32> to vector<1x1x32xf32>
    %25 = vector.broadcast %24 : vector<1x1x32xf32> to vector<1x8x32xf32>
    %26 = arith.mulf %22, %25 : vector<1x8x32xf32>
    %c0_10 = arith.constant 0 : index
    %c0_11 = arith.constant 0 : index
    %c0_12 = arith.constant 0 : index
    %27 = vector.load %arg3[%c0_10, %c0_11, %c0_12] : memref<1x8x32xf32, #tpu.memory_space<vmem>>, vector<1x8x32xf32>
    tpu.vector_store %arg3[%c0_10, %c0_11, %c0_12], %26 {strides = array<i32>} : memref<1x8x32xf32, #tpu.memory_space<vmem>>, vector<1x8x32xf32>,
    return
  }
  func.func @transform_0(%arg0: i32) -> (i32, i32, i32) {
    %c0_i32 = arith.constant 0 : i32
    %c0_i32_0 = arith.constant 0 : i32
    %c0_i32_1 = arith.constant 0 : i32
    return %arg0, %c0_i32, %c0_i32_0 : i32, i32, i32
  }
  func.func @transform_1(%arg0: i32) -> (i32, i32) {
    %c0_i32 = arith.constant 0 : i32
    %c0_i32_0 = arith.constant 0 : i32
    %c0_i32_1 = arith.constant 0 : i32
    return %c0_i32, %c0_i32_0 : i32, i32
  }
  func.func @transform_2(%arg0: i32) -> (i32, i32, i32) {
    %c0_i32 = arith.constant 0 : i32
    %c0_i32_0 = arith.constant 0 : i32
    %c0_i32_1 = arith.constant 0 : i32
    return %arg0, %c0_i32, %c0_i32_0 : i32, i32, i32
  }
}

</mosaic_0001>

<llo_original>
// kernel: tpu_custom_call.1
$region0: #{tpu_custom_call.1}
  #allocation0 [shape = 'u32[]', space=smem, size = 0x4, offset = 0x4, fixed_abs, tag = 'smem constant byte address 0x4 - core index']
  #allocation1 [shape = 'u32[144,128]{1,0:T(1,128)}', space=vmem, size = 0x12000, scoped, tag = 'internal scratch']
  %s0 = inlined_call_operand.hbm [shape: f32[2,8,32], index: 0, kind: input, shape index: {}]
  %s1 = inlined_call_operand.vmem [shape: f32[1,32], index: 1, kind: input, shape index: {}]
  %s2 = inlined_call_operand.hbm [shape: f32[2,8,32], index: 2, kind: output, shape index: {}]
  %s3 = sld [smem:[#allocation0]]
  $region45: #{tpu_custom_call.1} parent=0
    _
  %s5 = ssub.s32 1, %s3
  %s6 = scalar_select 0, %s5, %s3
  $region1: #{tpu_custom_call.1} parent=0
    #allocation2 [shape = 'u8[8192]{0}', space=vmem, size = 0x2000, scoped, tag = 'input window, operand 0']
    #allocation3 [shape = 's32[2]{0}', space=sflag, size = 0x8, scoped, tag = 'scoped memory for tpu_custom_call.1']
    #allocation4 [shape = 's32[2]{0}', space=sflag, size = 0x8, scoped, tag = 'scoped memory for tpu_custom_call.1']
    #allocation5 [shape = 'u8[8192]{0}', space=vmem, size = 0x2000, scoped, tag = 'output window, operand 0']
    %7 = vsyncpa [#allocation3], 0
    %s8 = scalar_lea.sflag [#allocation3], 1
    %9 = vsyncpa %s8, 0
    %10 = vsyncpa [#allocation4], 0
    %s11 = scalar_lea.sflag [#allocation4], 1
    %12 = vsyncpa %s11, 0
    loop: start=0, step=1, limit=4
    $region2: #{tpu_custom_call.1} parent=1 // loop_pre_header
      _
    $region3: #{tpu_custom_call.1} parent=1 // loop_header
      %s14 = sphi 0, %s18
      %p15 = scmp.ge.s32.totalorder %s14, 4
      %s24 = sphi 0, %s26
      %s27 = sphi 0, %s24
      %s28 = sphi 0, %s27
      %s44 = sphi 0, %s28
      %s48 = sphi 0, %s48
      %s50 = sphi 0, %s48
      %s51 = sphi 0, %s50
      %s65 = sphi 0, %s51
      %s71 = sphi 0, %s73
      %s74 = sphi 0, %s71
      %s75 = sphi 0, %s74
      %s91 = sphi 0, %s75
    $region4: #{tpu_custom_call.1} parent=1 // loop_header_branch
      %17 = sbr.rel (%p15) target = $region8
    $region5: #{tpu_custom_call.1} parent=1 // loop_body
      %s19 = ssub.s32 %s14, 1
      %s20 = ssub.s32 %s14, 2
      %s21 = sadd.s32 %s14, 1
      %s22 = ssub.s32 %s14, %s21
      %p23 = scmp.eq.s32.totalorder %s22, 0
      %s25 = sadd.s32 %s24, 1
      %s26 = scalar_select %p23, %s24, %s25
      %p29 = pneg %p23
      %p30 = scmp.eq.s32.totalorder %s14, 1
      %p31 = por %p29, %p30
      %p32 = scmp.ne.s32.totalorder %s24, %s27
      %p33 = scmp.eq.s32.totalorder %s14, 0
      %p34 = por %p32, %p33
      %p35 = scmp.ne.s32.totalorder %s24, %s27
      %p36 = scmp.eq.s32.totalorder %s19, 1
      %p37 = por %p35, %p36
      %p38 = scmp.ne.s32.totalorder %s27, %s28
      %p39 = scmp.eq.s32.totalorder %s19, 0
      %p40 = por %p38, %p39
      %p41 = scmp.ne.s32.totalorder %s27, %s28
      %p42 = scmp.eq.s32.totalorder %s20, 1
      %p43 = por %p41, %p42
      %p45 = scmp.ne.s32.totalorder %s28, %s44
      %p46 = scmp.eq.s32.totalorder %s20, 0
      %p47 = por %p45, %p46
      %s49 = sadd.s32 %s48, 1
      %p52 = scmp.eq.s32.totalorder %s14, 1
      %p53 = scmp.ne.s32.totalorder %s48, %s50
      %p54 = scmp.eq.s32.totalorder %s14, 0
      %p55 = por %p53, %p54
      %p56 = scmp.ne.s32.totalorder %s48, %s50
      %p57 = scmp.eq.s32.totalorder %s19, 1
      %p58 = por %p56, %p57
      %p59 = scmp.ne.s32.totalorder %s50, %s51
      %p60 = scmp.eq.s32.totalorder %s19, 0
      %p61 = por %p59, %p60
      %p62 = scmp.ne.s32.totalorder %s50, %s51
      %p63 = scmp.eq.s32.totalorder %s20, 1
      %p64 = por %p62, %p63
      %p66 = scmp.ne.s32.totalorder %s51, %s65
      %p67 = scmp.eq.s32.totalorder %s20, 0
      %p68 = por %p66, %p67
      %s69 = ssub.s32 %s14, %s21
      %p70 = scmp.eq.s32.totalorder %s69, 0
      %s72 = sadd.s32 %s71, 1
      %s73 = scalar_select %p70, %s71, %s72
      %p76 = pneg %p70
      %p77 = scmp.eq.s32.totalorder %s14, 1
      %p78 = por %p76, %p77
      %p79 = scmp.ne.s32.totalorder %s71, %s74
      %p80 = scmp.eq.s32.totalorder %s14, 0
      %p81 = por %p79, %p80
      %p82 = scmp.ne.s32.totalorder %s71, %s74
      %p83 = scmp.eq.s32.totalorder %s19, 1
      %p84 = por %p82, %p83
      %p85 = scmp.ne.s32.totalorder %s74, %s75
      %p86 = scmp.eq.s32.totalorder %s19, 0
      %p87 = por %p85, %p86
      %p88 = scmp.ne.s32.totalorder %s74, %s75
      %p89 = scmp.eq.s32.totalorder %s20, 1
      %p90 = por %p88, %p89
      %p92 = scmp.ne.s32.totalorder %s75, %s91
      %p93 = scmp.eq.s32.totalorder %s20, 0
      %p94 = por %p92, %p93
      %p95 = scmp.le.s32.totalorder 1, %s14
      %p96 = scmp.lt.s32.totalorder %s14, 3
      %p97 = pnand %p95, %p96
      %p98 = pneg %p97
      // Predicated region
      $region9: #{tpu_custom_call.1} parent=5 // pred_check
        _
      $region10: #{tpu_custom_call.1} parent=5 // pred_check_branch
        %100 = sbr.rel (%p97) target = $region12
      $region11: #{tpu_custom_call.1} parent=5 // pred_region
        %s101 = ssub.s32 %s14, 1
        // Predicated region
        $region13: #{tpu_custom_call.1} parent=11 // pred_check
          %p102 = pneg %p61
        $region14: #{tpu_custom_call.1} parent=11 // pred_check_branch
          %104 = sbr.rel (%p102) target = $region16
        $region15: #{tpu_custom_call.1} parent=11 // pred_region
          _
        $region16: #{tpu_custom_call.1} parent=11 // pred_fallthru
          _
      $region12: #{tpu_custom_call.1} parent=5 // pred_fallthru
        _
      %p105 = scmp.lt.s32.totalorder %s14, 2
      // Predicated region
      $region17: #{tpu_custom_call.1} parent=5 // pred_check
        %p106 = pneg %p105
      $region18: #{tpu_custom_call.1} parent=5 // pred_check_branch
        %108 = sbr.rel (%p106) target = $region20
      $region19: #{tpu_custom_call.1} parent=5 // pred_region
        // Predicated region
        $region21: #{tpu_custom_call.1} parent=19 // pred_check
          %p109 = pneg %p34
        $region22: #{tpu_custom_call.1} parent=19 // pred_check_branch
          %111 = sbr.rel (%p109) target = $region24
        $region23: #{tpu_custom_call.1} parent=19 // pred_region
          %s112 = sand.u32 %s24, 1
          %s113 = scalar_lea.sflag [#allocation3], %s112
          %s114 = sand.u32 %s24, 1
          %s115 = smul.addr %s114, 8
          %s116 = scalar_lea.vmem [#allocation2], %s115
          %s118 = ssub.s32 128, 128
          %119 = vsyncadd %s113, %s118
          %s120 = smul.addr %s14, 128
          %s121 = scalar_lea.hbm %s0, %s120
          %s123 = sshll.u32 %s116, 4
          %s124 = int_to_ptr.vmem [resolvable:$true] %s123
          %126 = dma.hbm_to_vmem [thread:$0]  %s121, 128, %s124, %s113
        $region24: #{tpu_custom_call.1} parent=19 // pred_fallthru
          _
      $region20: #{tpu_custom_call.1} parent=5 // pred_fallthru
        _
      %p127 = scmp.le.s32.totalorder 1, %s14
      %p128 = scmp.lt.s32.totalorder %s14, 3
      %p129 = pnand %p127, %p128
      %p130 = pneg %p129
      // Predicated region
      $region25: #{tpu_custom_call.1} parent=5 // pred_check
        _
      $region26: #{tpu_custom_call.1} parent=5 // pred_check_branch
        %132 = sbr.rel (%p129) target = $region28
      $region27: #{tpu_custom_call.1} parent=5 // pred_region
        %s133 = ssub.s32 %s14, 1
        %s134 = sand.u32 %s27, 1
        %s135 = scalar_lea.sflag [#allocation3], %s134
        %s136 = sand.u32 %s27, 1
        %s137 = smul.addr %s136, 8
        %s138 = scalar_lea.vmem [#allocation2], %s137
        // Predicated region
        $region29: #{tpu_custom_call.1} parent=27 // pred_check
          %p139 = pneg %p40
        $region30: #{tpu_custom_call.1} parent=27 // pred_check_branch
          %141 = sbr.rel (%p139) target = $region32
        $region31: #{tpu_custom_call.1} parent=27 // pred_region
          %142 = dma.done %s135, 128
        $region32: #{tpu_custom_call.1} parent=27 // pred_fallthru
          _
        %s143 = sand.u32 %s27, 1
        %s144 = scalar_lea.sflag [#allocation3], %s143
        %s145 = sand.u32 %s27, 1
        %s146 = smul.addr %s145, 8
        %s147 = scalar_lea.vmem [#allocation2], %s146
        %p148 = pneg %p40
        %p149 = pneg %p37
        %p150 = pneg %p61
        %p151 = pneg %p58
        %p152 = pneg %p87
        %p153 = pneg %p84
        %s154 = sand.u32 %s74, 1
        %s155 = scalar_lea.sflag [#allocation4], %s154
        %s156 = sand.u32 %s74, 1
        %s157 = smul.addr %s156, 8
        %s158 = scalar_lea.vmem [#allocation5], %s157
        %v159 = vld [vmem:[%s138] sm:$0xff]
        %vm160 = vcmask 261120
        %v161 = vsel %vm160, %v159, 0.0
        %162 = vadd.xlane.f32.xlu0 %v161
        %v163 = vpop.xlane.xlu0 %162
        %v164 = vrcp.pop 32.0
        %v165 = vmul.f32 %v163, %v164
        %v166 = vsub.f32 %v159, %v165
        %v167 = vmul.f32 %v166, %v166
        %v168 = vsel %vm160, %v167, 0.0
        %169 = vadd.xlane.f32.xlu0 %v168
        %v170 = vpop.xlane.xlu0 %169
        %v171 = vmul.f32 %v170, %v164
        %v172 = vadd.f32 %v171, 1e-05
        %v173 = vrsqrt.pop %v172
        %v174 = vmul.f32 %v166, %v173
        %v175 = vsel %vm160, %v174, 0.0
        %v176 = vrot.slane %v175, 4
        %v177 = vadd.f32 %v175, %v176
        %v178 = vrot.slane %v177, 2
        %v179 = vadd.f32 %v177, %v178
        %v180 = vrot.slane %v179, 1
        %v181 = vadd.f32 %v179, %v180
        %v182 = vrcp.pop 8.0
        %v183 = vmul.f32 %v181, %v182
        %v184 = vsub.f32 %v174, %v183
        %v185 = vld [vmem:[%s1] sm:$0x1]
        %v187 = vlaneseq
        %v188 = vshrl.u32 %v187, 7
        %v189 = vsub.s32 0, %v188
        %v190 = vrot.slane %v185, %v189
        %v192 = vmul.f32 %v184, %v190
        %193 = vst.msk [vmem:[%s158] sm:$0xff] %vm160, %v192
        %s194 = sand.u32 %s74, 1
        %s195 = scalar_lea.sflag [#allocation4], %s194
        %s196 = sand.u32 %s74, 1
        %s197 = smul.addr %s196, 8
        %s198 = scalar_lea.vmem [#allocation5], %s197
        // Predicated region
        $region33: #{tpu_custom_call.1} parent=27 // pred_check
          %p199 = pneg %p84
        $region34: #{tpu_custom_call.1} parent=27 // pred_check_branch
          %201 = sbr.rel (%p199) target = $region36
        $region35: #{tpu_custom_call.1} parent=27 // pred_region
          %s203 = ssub.s32 128, 128
          %204 = vsyncadd %s195, %s203
          %s205 = smul.addr %s19, 128
          %s206 = scalar_lea.hbm %s2, %s205
          %s208 = sshll.u32 %s198, 4
          %s209 = int_to_ptr.vmem [resolvable:$true] %s208
          %211 = dma.vmem_to_hbm [thread:$0]  %s209, 128, %s206, %s195
        $region36: #{tpu_custom_call.1} parent=27 // pred_fallthru
          _
      $region28: #{tpu_custom_call.1} parent=5 // pred_fallthru
        _
      %p212 = scmp.le.s32.totalorder 2, %s14
      // Predicated region
      $region37: #{tpu_custom_call.1} parent=5 // pred_check
        %p213 = pneg %p212
      $region38: #{tpu_custom_call.1} parent=5 // pred_check_branch
        %215 = sbr.rel (%p213) target = $region40
      $region39: #{tpu_custom_call.1} parent=5 // pred_region
        %s216 = ssub.s32 %s14, 2
        // Predicated region
        $region41: #{tpu_custom_call.1} parent=39 // pred_check
          %p217 = pneg %p90
        $region42: #{tpu_custom_call.1} parent=39 // pred_check_branch
          %219 = sbr.rel (%p217) target = $region44
        $region43: #{tpu_custom_call.1} parent=39 // pred_region
          %s220 = sand.u32 %s75, 1
          %s221 = scalar_lea.sflag [#allocation4], %s220
          %s222 = sand.u32 %s75, 1
          %s223 = smul.addr %s222, 8
          %s224 = scalar_lea.vmem [#allocation5], %s223
          %225 = dma.done %s221, 128
        $region44: #{tpu_custom_call.1} parent=39 // pred_fallthru
          _
      $region40: #{tpu_custom_call.1} parent=5 // pred_fallthru
        _
    $region6: #{tpu_custom_call.1} parent=1 // loop_footer
      %s18 = sadd.s32 1, %s14
    $region7: #{tpu_custom_call.1} parent=1 // loop_footer_branch
      %13 = sbr.rel target = $region3
    $region8: #{tpu_custom_call.1} parent=1 // loop_exit
      _
    %226 = vsyncpa [#allocation3], 1
    %s227 = scalar_lea.sflag [#allocation3], 1
    %228 = vsyncpa %s227, 1
    %229 = vsyncpa [#allocation4], 1
    %s230 = scalar_lea.sflag [#allocation4], 1
    %231 = vsyncpa %s230, 1

</llo_original>
